<compile_context>
chip_gen: v5e
topology: v5e:2x2
jax: 0.10.0
libtpu: 0.0.40
codegen_flags: <defaults>
</compile_context>

<pallas_src>
import jax
import jax.numpy as jnp
from jax.experimental import pallas as pl
from jax.experimental.pallas import tpu as pltpu


def _round_up(x, m):
    return pl.cdiv(x, m) * m


def _vmem_budget():
    """(tile budget bytes, vmem_limit_bytes), generation-aware."""
    try:
        cap = int(pltpu.get_tpu_info().vmem_capacity_bytes)
    except Exception:
        cap = 64 * 1024 * 1024          # conservative (v7x-sized) fallback
    vmem_limit = min(int(cap * 0.75), cap - (8 << 20))
    tile_budget = max(8 << 20, int(cap * 0.35))
    return tile_budget, int(vmem_limit)


# --------------------------------------------------------------------------
# Kernels
# --------------------------------------------------------------------------
def _segment_sum_kernel_direct(seg_ref, v_ref, o_ref):
    """float32 output: accumulate straight into the resident output block."""
    k_idx = pl.program_id(1)
    s_idx = pl.program_id(3)

    @pl.when(s_idx == 0)
    def _():
        o_ref[...] = jnp.zeros_like(o_ref)

    tk = o_ref.shape[1]
    ts = seg_ref.shape[1]
    rows = jax.lax.broadcasted_iota(jnp.int32, (tk, ts), 0) + k_idx * tk
    onehot = (rows == seg_ref[...]).astype(v_ref.dtype)       # (tk, ts)
    o_ref[0] += jnp.dot(onehot, v_ref[0], preferred_element_type=jnp.float32)


def _segment_sum_kernel_acc(seg_ref, v_ref, o_ref, acc_ref):
    """Low-precision output: f32 VMEM accumulator, cast once at the end."""
    k_idx = pl.program_id(1)
    s_idx = pl.program_id(3)

    @pl.when(s_idx == 0)
    def _():
        acc_ref[...] = jnp.zeros_like(acc_ref)

    tk = acc_ref.shape[0]
    ts = seg_ref.shape[1]
    rows = jax.lax.broadcasted_iota(jnp.int32, (tk, ts), 0) + k_idx * tk
    onehot = (rows == seg_ref[...]).astype(v_ref.dtype)       # (tk, ts)
    acc_ref[...] += jnp.dot(onehot, v_ref[0],
                            preferred_element_type=jnp.float32)

    @pl.when(s_idx == pl.num_programs(3) - 1)
    def _():
        o_ref[0] = acc_ref[...].astype(o_ref.dtype)


# --------------------------------------------------------------------------
# Wrappers
# --------------------------------------------------------------------------
def _unsorted_segment_sum_xla(v3, segment_index, num_segments):
    """Plain-XLA fallback (tiny problems / integer dtypes)."""
    seg = segment_index.astype(jnp.int32)
    onehot = (jnp.arange(num_segments, dtype=jnp.int32)[:, None]
              == seg[None, :])
    if jnp.issubdtype(v3.dtype, jnp.floating):
        out = jnp.einsum("ks,bsf->bkf", onehot.astype(v3.dtype), v3,
                         preferred_element_type=jnp.float32)
        return out.astype(v3.dtype)
    # Integer / bool: keep accumulation exact in the input dtype family.
    return jnp.einsum("ks,bsf->bkf", onehot.astype(v3.dtype), v3
                      ).astype(v3.dtype)


def _unsorted_segment_sum_pallas(v3, segment_index, num_segments):
    """v3: (B, S, F) float, segment_index: (S,) int -> (B, num_segments, F)."""
    b, s, f = v3.shape
    dtype = v3.dtype
    itemsize = jnp.dtype(dtype).itemsize

    tile_budget, vmem_limit = _vmem_budget()

    # --- K (segment / output-row) tiling, dtype-aware sublane rounding ---
    k_sublane = max(8, 32 // itemsize)     # 8 for f32, 16 for bf16, 32 for i8
    k_pad = _round_up(num_segments, k_sublane)
    if k_pad > 1024:
        tk = 512                           # multiple of 256 (MXU M) & k_sublane
        k_pad = _round_up(k_pad, tk)
    else:
        tk = k_pad

    # --- S (reduction) tiling ---
    max_ts = 1024
    if s <= max_ts:
        ts, s_pad = s, s
    else:
        ts = max_ts
        s_pad = _round_up(s, ts)

    # --- F (feature) tiling: lane-dense, sized from the VMEM budget ---
    use_acc = jnp.dtype(dtype) != jnp.dtype(jnp.float32)
    per_lane = (2 * ts * itemsize          # double-buffered v tile
                + 2 * tk * itemsize        # double-buffered out tile
                + (4 * tk if use_acc else 0))   # f32 accumulator scratch
    seg_bytes = 2 * ts * 4                 # double-buffered segment-id row
    tf_cap = max(128, ((tile_budget - seg_bytes) // per_lane) // 128 * 128)
    f_pad128 = _round_up(max(f, 1), 128)
    if f_pad128 <= tf_cap:
        tf = f_pad128                      # single F tile, no extra padding
    else:
        tf = 128
        for cand in (4096, 2048, 1024, 512, 256):
            if cand <= tf_cap:
                tf = cand
                break
    f_pad = _round_up(f_pad128, tf)

    # v7x shards the "parallel" grid axes over 2 TensorCores: make sure a
    # single-batch / single-tile launch still has >= 2 parallel blocks.
    if b * (k_pad // tk) * (f_pad // tf) == 1 and f_pad >= 1024:
        cand = (f_pad // 256) * 128        # largest mult-of-128 <= f_pad / 2
        while cand >= 512:
            if f_pad % cand == 0:
                tf = cand
                break
            cand -= 128

    # --- Padding (zero rows/lanes contribute nothing; padded ids = -1) ---
    v_p = v3
    if s_pad != s or f_pad != f:
        v_p = jnp.pad(v3, ((0, 0), (0, s_pad - s), (0, f_pad - f)))
    seg = segment_index.astype(jnp.int32)
    if s_pad != s:
        seg = jnp.pad(seg, (0, s_pad - s), constant_values=-1)
    seg = seg.reshape(1, s_pad)

    grid = (b, k_pad // tk, f_pad // tf, s_pad // ts)

    kernel = _segment_sum_kernel_acc if use_acc else _segment_sum_kernel_direct
    scratch = [pltpu.VMEM((tk, tf), jnp.float32)] if use_acc else []

    bytes_accessed = (b * s_pad * f_pad * itemsize               # v read
                      + b * k_pad * f_pad * itemsize             # out write
                      + b * (k_pad // tk) * (f_pad // tf) * s_pad * 4)  # ids
    cost = pl.CostEstimate(flops=2 * b * k_pad * s_pad * f_pad,
                           transcendentals=0,
                           bytes_accessed=bytes_accessed)

    out_p = pl.pallas_call(
        kernel,
        out_shape=jax.ShapeDtypeStruct((b, k_pad, f_pad), dtype),
        grid_spec=pltpu.PrefetchScalarGridSpec(
            num_scalar_prefetch=0,
            grid=grid,
            in_specs=[
                # Segment ids for this S tile (ts*4 bytes -> negligible DMA).
                pl.BlockSpec((1, ts), lambda bi, ki, fi, si: (0, si)),
                # v tile in its native dtype, lane-dense.
                pl.BlockSpec((1, ts, tf), lambda bi, ki, fi, si: (bi, si, fi)),
            ],
            # Output block constant across the S (reduction) axis.
            out_specs=pl.BlockSpec((1, tk, tf),
                                   lambda bi, ki, fi, si: (bi, ki, fi)),
            scratch_shapes=scratch,
        ),
        compiler_params=pltpu.CompilerParams(
            dimension_semantics=("parallel", "parallel", "parallel",
                                 "arbitrary"),
            vmem_limit_bytes=vmem_limit,
        ),
        cost_estimate=cost,
    )(seg, v_p)

    return out_p[:, :num_segments, :f]


def unsorted_segment_sum(v3, segment_index, num_segments, prefer_pallas=None):
    """Dispatch: Pallas kernel for float inputs of meaningful size, XLA else."""
    b, s, f = v3.shape
    is_float = jnp.issubdtype(v3.dtype, jnp.floating)
    if prefer_pallas is None:
        tiny = b * s * max(f, 1) < (1 << 17)   # launch/padding overhead regime
        prefer_pallas = is_float and not tiny
    if (not prefer_pallas) or (not is_float):
        return _unsorted_segment_sum_xla(v3, segment_index, num_segments)
    return _unsorted_segment_sum_pallas(v3, segment_index, num_segments)


class FDUnsortedSegmentSum:
    """JAX/Pallas port of the PyTorch FDUnsortedSegmentSum module."""

    def __init__(self, num_segments):
        self.num_segments = num_segments

    def __call__(self, data, v, segment_index, dim=1):
        assert data.shape == v.shape, "{} vs {}".format(data.shape, v.shape)
        if dim != 1:
            v = jnp.swapaxes(v, dim, 1)
        size_prev = list(v.shape)
        v3 = v.reshape(size_prev[0], size_prev[1], -1)
        out3 = unsorted_segment_sum(v3, segment_index, self.num_segments)
        size_prev[1] = self.num_segments
        out = out3.reshape(size_prev)
        if dim != 1:
            out = jnp.swapaxes(out, dim, 1)
        return out


# --------------------------------------------------------------------------
# Self-test
# --------------------------------------------------------------------------
def _ref_segment_sum(v3, seg, k):
    onehot = (jnp.arange(k, dtype=jnp.int32)[:, None]
              == seg.astype(jnp.int32)[None, :]).astype(jnp.float32)
    out = jnp.einsum("ks,bsf->bkf", onehot, v3.astype(jnp.float32))
    return out.astype(v3.dtype)


if __name__ == "__main__":
    key = jax.random.PRNGKey(0)
    ks = jax.random.split(key, 8)

    # 1) Module-level test at small shapes (matches the PyTorch spec usage).
    B, S, H, W = 2, 8, 4, 8
    NUM_SEGMENTS = 4
    data = jax.random.normal(ks[0], (B, S, H, W), dtype=jnp.float32)
    v = jax.random.normal(ks[1], (B, S, H, W), dtype=jnp.float32)
    seg = jax.random.randint(ks[2], (S,), 0, NUM_SEGMENTS, dtype=jnp.int32)
    mod = FDUnsortedSegmentSum(NUM_SEGMENTS)
    out = jax.block_until_ready(mod(data, v, seg, dim=1))
    ref = _ref_segment_sum(v.reshape(B, S, -1), seg, NUM_SEGMENTS
                           ).reshape(B, NUM_SEGMENTS, H, W)
    assert out.shape == (B, NUM_SEGMENTS, H, W), out.shape
    assert jnp.allclose(out, ref, atol=1e-5, rtol=1e-5), "module path mismatch"

    # 2) Pallas kernel, float32 direct-accumulate path, multiple S steps.
    B2, S2, F2, K2 = 2, 2500, 192, 10
    v2 = jax.random.normal(ks[3], (B2, S2, F2), dtype=jnp.float32)
    seg2 = jax.random.randint(ks[4], (S2,), 0, K2, dtype=jnp.int32)
    out2 = jax.block_until_ready(
        unsorted_segment_sum(v2, seg2, K2, prefer_pallas=True))
    ref2 = _ref_segment_sum(v2, seg2, K2)
    assert jnp.allclose(out2, ref2, atol=1e-3, rtol=1e-3), "f32 kernel mismatch"

    # 3) Pallas kernel, bfloat16 (f32 scratch accumulator path).
    v3b = jax.random.normal(ks[5], (2, 640, 256),
                            dtype=jnp.float32).astype(jnp.bfloat16)
    seg3 = jax.random.randint(ks[6], (640,), 0, 12, dtype=jnp.int32)
    out3 = jax.block_until_ready(
        unsorted_segment_sum(v3b, seg3, 12, prefer_pallas=True))
    ref3 = _ref_segment_sum(v3b, seg3, 12)
    assert jnp.allclose(out3.astype(jnp.float32), ref3.astype(jnp.float32),
                        atol=5e-2, rtol=5e-2), "bf16 kernel mismatch"

    # 4) Pallas kernel, large num_segments (K-tiling path).
    K4 = 1300
    v4 = jax.random.normal(ks[7], (1, 256, 128), dtype=jnp.float32)
    seg4 = jax.random.randint(jax.random.PRNGKey(42), (256,), 0, K4,
                              dtype=jnp.int32)
    out4 = jax.block_until_ready(
        unsorted_segment_sum(v4, seg4, K4, prefer_pallas=True))
    ref4 = _ref_segment_sum(v4, seg4, K4)
    assert jnp.allclose(out4, ref4, atol=1e-4, rtol=1e-4), "K-tiled mismatch"

    print("KERNEL_OK")
</pallas_src>

<mosaic_0001>
module attributes {stable_mosaic.version = 11 : i64} {
  func.func @_segment_sum_kernel_direct(%arg0: i32, %arg1: i32, %arg2: i32, %arg3: i32, %arg4: memref<1x1024xi32, #tpu.memory_space<vmem>>, %arg5: memref<1x1024x256xf32, #tpu.memory_space<vmem>>, %arg6: memref<1x16x256xf32, #tpu.memory_space<vmem>>) attributes {dimension_semantics = [#tpu.dimension_semantics<parallel>, #tpu.dimension_semantics<parallel>, #tpu.dimension_semantics<parallel>, #tpu.dimension_semantics<arbitrary>], iteration_bounds = array<i64: 2, 1, 1, 3>, scalar_prefetch = 0 : i64, scratch_operands = 0 : i64, tpu.core_type = #tpu.core_type<tc>, window_params = [{transform_indices = @transform_0, window_bounds = array<i64: 1, 1024>}, {transform_indices = @transform_1, window_bounds = array<i64: 1, 1024, 256>}, {transform_indices = @transform_2, window_bounds = array<i64: 1, 16, 256>}]} {
    %c0_i32 = arith.constant 0 : i32
    %0 = arith.cmpi eq, %arg3, %c0_i32 : i32
    %1 = arith.extui %0 : i1 to i32
    %c0_i32_0 = arith.constant 0 : i32
    %2 = arith.cmpi ne, %1, %c0_i32_0 : i32
    scf.if %2 {
      %cst_11 = arith.constant 0.000000e+00 : f32
      %21 = vector.broadcast %cst_11 : f32 to vector<1x16x256xf32>
      %c0_12 = arith.constant 0 : index
      %c0_13 = arith.constant 0 : index
      %c0_14 = arith.constant 0 : index
      %22 = vector.load %arg6[%c0_12, %c0_13, %c0_14] : memref<1x16x256xf32, #tpu.memory_space<vmem>>, vector<1x16x256xf32>
      tpu.vector_store %arg6[%c0_12, %c0_13, %c0_14], %21 {strides = array<i32>} : memref<1x16x256xf32, #tpu.memory_space<vmem>>, vector<1x16x256xf32>,
    } else {
    }
    %3 = tpu.iota {dimensions = array<i32: 0>} : vector<16x1024xi32>
    %c16_i32 = arith.constant 16 : i32
    %4 = arith.muli %arg1, %c16_i32 : i32
    %5 = vector.broadcast %4 : i32 to vector<16x1024xi32>
    %6 = arith.addi %3, %5 : vector<16x1024xi32>
    %c0 = arith.constant 0 : index
    %c0_1 = arith.constant 0 : index
    %7 = vector.load %arg4[%c0, %c0_1] : memref<1x1024xi32, #tpu.memory_space<vmem>>, vector<1x1024xi32>
    %8 = vector.broadcast %7 : vector<1x1024xi32> to vector<16x1024xi32>
    %9 = arith.cmpi eq, %6, %8 : vector<16x1024xi32>
    %10 = arith.extui %9 : vector<16x1024xi1> to vector<16x1024xi32>
    %11 = arith.sitofp %10 : vector<16x1024xi32> to vector<16x1024xf32>
    %c0_2 = arith.constant 0 : index
    %c0_3 = arith.constant 0 : index
    %c0_4 = arith.constant 0 : index
    %12 = vector.load %arg6[%c0_2, %c0_3, %c0_4] : memref<1x16x256xf32, #tpu.memory_space<vmem>>, vector<1x16x256xf32>
    %13 = vector.shape_cast %12 : vector<1x16x256xf32> to vector<16x256xf32>
    %c0_5 = arith.constant 0 : index
    %c0_6 = arith.constant 0 : index
    %c0_7 = arith.constant 0 : index
    %14 = vector.load %arg5[%c0_5, %c0_6, %c0_7] : memref<1x1024x256xf32, #tpu.memory_space<vmem>>, vector<1x1024x256xf32>
    %15 = vector.shape_cast %14 : vector<1x1024x256xf32> to vector<1024x256xf32>
    %cst = arith.constant dense<0.000000e+00> : vector<16x256xf32>
    %16 = tpu.matmul %11, %15, %cst {dimension_numbers = #tpu.dot_dimension_numbers<[1], [0], [0], [1], [0, 0, 1, 1], [], []>} : vector<16x1024xf32>, vector<1024x256xf32>, vector<16x256xf32> -> vector<16x256xf32>
    %17 = arith.addf %13, %16 : vector<16x256xf32>
    %c0_8 = arith.constant 0 : index
    %c0_9 = arith.constant 0 : index
    %c0_10 = arith.constant 0 : index
    %18 = vector.load %arg6[%c0_8, %c0_9, %c0_10] : memref<1x16x256xf32, #tpu.memory_space<vmem>>, vector<1x16x256xf32>
    %19 = vector.shape_cast %18 : vector<1x16x256xf32> to vector<16x256xf32>
    %20 = vector.shape_cast %17 : vector<16x256xf32> to vector<1x16x256xf32>
    tpu.vector_store %arg6[%c0_8, %c0_9, %c0_10], %20 {strides = array<i32>} : memref<1x16x256xf32, #tpu.memory_space<vmem>>, vector<1x16x256xf32>,
    return
  }
  func.func @transform_0(%arg0: i32, %arg1: i32, %arg2: i32, %arg3: i32) -> (i32, i32) {
    %c0_i32 = arith.constant 0 : i32
    %c0_i32_0 = arith.constant 0 : i32
    return %c0_i32, %arg3 : i32, i32
  }
  func.func @transform_1(%arg0: i32, %arg1: i32, %arg2: i32, %arg3: i32) -> (i32, i32, i32) {
    %c0_i32 = arith.constant 0 : i32
    return %arg0, %arg3, %arg2 : i32, i32, i32
  }
  func.func @transform_2(%arg0: i32, %arg1: i32, %arg2: i32, %arg3: i32) -> (i32, i32, i32) {
    %c0_i32 = arith.constant 0 : i32
    return %arg0, %arg1, %arg2 : i32, i32, i32
  }
}

</mosaic_0001>

<llo_original>
// kernel: tpu_custom_call.1
$region0: #{tpu_custom_call.1}
  #allocation0 [shape = 'u32[]', space=smem, size = 0x4, offset = 0x4, fixed_abs, tag = 'smem constant byte address 0x4 - core index']
  #allocation1 [shape = 'u32[72,128]{1,0:T(1,128)}', space=vmem, size = 0x9000, scoped, tag = 'internal scratch']
  %s0 = inlined_call_operand.hbm [shape: s32[1,3072], index: 0, kind: input, shape index: {}]
  %s1 = inlined_call_operand.hbm [shape: f32[2,3072,256], index: 1, kind: input, shape index: {}]
  %s2 = inlined_call_operand.hbm [shape: f32[2,16,256], index: 2, kind: output, shape index: {}]
  %s3 = sld [smem:[#allocation0]]
  $region53: #{tpu_custom_call.1} parent=0
    _
  %s5 = ssub.s32 1, %s3
  %s6 = scalar_select 0, %s5, %s3
  $region1: #{tpu_custom_call.1} parent=0
    #allocation2 [shape = 'u8[8192]{0}', space=vmem, size = 0x2000, scoped, tag = 'input window, operand 0']
    #allocation3 [shape = 's32[2]{0}', space=sflag, size = 0x8, scoped, tag = 'scoped memory for tpu_custom_call.1']
    #allocation4 [shape = 's32[2]{0}', space=sflag, size = 0x8, scoped, tag = 'scoped memory for tpu_custom_call.1']
    #allocation5 [shape = 'u8[2097152]{0}', space=vmem, size = 0x200000, scoped, tag = 'input window, operand 1']
    #allocation6 [shape = 's32[2]{0}', space=sflag, size = 0x8, scoped, tag = 'scoped memory for tpu_custom_call.1']
    #allocation7 [shape = 'u8[32768]{0}', space=vmem, size = 0x8000, scoped, tag = 'output window, operand 0']
    %7 = vsyncpa [#allocation3], 0
    %s8 = scalar_lea.sflag [#allocation3], 1
    %9 = vsyncpa %s8, 0
    %10 = vsyncpa [#allocation6], 0
    %s11 = scalar_lea.sflag [#allocation6], 1
    %12 = vsyncpa %s11, 0
    %13 = vsyncpa [#allocation4], 0
    %s14 = scalar_lea.sflag [#allocation4], 1
    %15 = vsyncpa %s14, 0
    loop: start=0, step=1, limit=8
    $region2: #{tpu_custom_call.1} parent=1 // loop_pre_header
      _
    $region3: #{tpu_custom_call.1} parent=1 // loop_header
      %s17 = sphi 0, %s21
      %p18 = scmp.ge.s32.totalorder %s17, 8
      %s24 = sphi 0, %s50
      %s25 = sphi 0, %s46
      %s26 = sphi 0, %s42
      %s27 = sphi 0, %s38
      %s28 = sphi 0, %s24
      %s29 = sphi 0, %s25
      %s30 = sphi 0, %s26
      %s31 = sphi 0, %s27
      %s32 = sphi 0, %s28
      %s33 = sphi 0, %s29
      %s34 = sphi 0, %s30
      %s35 = sphi 0, %s31
      %s53 = sphi 0, %s55
      %s56 = sphi 0, %s53
      %s57 = sphi 0, %s56
      %s73 = sphi 0, %s57
      %s83 = sphi 0, %s85
      %s86 = sphi 0, %s83
      %s87 = sphi 0, %s86
      %s103 = sphi 0, %s87
      %s113 = sphi 0, %s115
      %s116 = sphi 0, %s113
      %s117 = sphi 0, %s116
      %s133 = sphi 0, %s117
    $region4: #{tpu_custom_call.1} parent=1 // loop_header_branch
      %20 = sbr.rel (%p18) target = $region8
    $region5: #{tpu_custom_call.1} parent=1 // loop_body
      %s22 = ssub.s32 %s17, 1
      %s23 = ssub.s32 %s17, 2
      %s36 = sadd.s32 1, %s27
      %p37 = scmp.ge.s32.totalorder %s36, 3
      %s38 = scalar_select %p37, 0, %s36
      %s39 = sadd.s32 1, %s26
      %s40 = scalar_select %p37, %s39, %s26
      %p41 = scmp.ge.s32.totalorder %s40, 1
      %s42 = scalar_select %p41, 0, %s40
      %s43 = sadd.s32 1, %s25
      %s44 = scalar_select %p41, %s43, %s25
      %p45 = scmp.ge.s32.totalorder %s44, 1
      %s46 = scalar_select %p45, 0, %s44
      %s47 = sadd.s32 1, %s24
      %s48 = scalar_select %p45, %s47, %s24
      %p49 = scmp.ge.s32.totalorder %s48, 2
      %s50 = scalar_select %p49, 0, %s48
      %s51 = ssub.s32 %s27, %s38
      %p52 = scmp.eq.s32.totalorder %s51, 0
      %s54 = sadd.s32 %s53, 1
      %s55 = scalar_select %p52, %s53, %s54
      %p58 = pneg %p52
      %p59 = scmp.eq.s32.totalorder %s17, 5
      %p60 = por %p58, %p59
      %p61 = scmp.ne.s32.totalorder %s53, %s56
      %p62 = scmp.eq.s32.totalorder %s17, 0
      %p63 = por %p61, %p62
      %p64 = scmp.ne.s32.totalorder %s53, %s56
      %p65 = scmp.eq.s32.totalorder %s22, 5
      %p66 = por %p64, %p65
      %p67 = scmp.ne.s32.totalorder %s56, %s57
      %p68 = scmp.eq.s32.totalorder %s22, 0
      %p69 = por %p67, %p68
      %p70 = scmp.ne.s32.totalorder %s56, %s57
      %p71 = scmp.eq.s32.totalorder %s23, 5
      %p72 = por %p70, %p71
      %p74 = scmp.ne.s32.totalorder %s57, %s73
      %p75 = scmp.eq.s32.totalorder %s23, 0
      %p76 = por %p74, %p75
      %s77 = ssub.s32 %s24, %s50
      %s78 = ssub.s32 %s27, %s38
      %s79 = sor.u32 %s77, %s78
      %s80 = ssub.s32 %s26, %s42
      %s81 = sor.u32 %s79, %s80
      %p82 = scmp.eq.s32.totalorder %s81, 0
      %s84 = sadd.s32 %s83, 1
      %s85 = scalar_select %p82, %s83, %s84
      %p88 = pneg %p82
      %p89 = scmp.eq.s32.totalorder %s17, 5
      %p90 = por %p88, %p89
      %p91 = scmp.ne.s32.totalorder %s83, %s86
      %p92 = scmp.eq.s32.totalorder %s17, 0
      %p93 = por %p91, %p92
      %p94 = scmp.ne.s32.totalorder %s83, %s86
      %p95 = scmp.eq.s32.totalorder %s22, 5
      %p96 = por %p94, %p95
      %p97 = scmp.ne.s32.totalorder %s86, %s87
      %p98 = scmp.eq.s32.totalorder %s22, 0
      %p99 = por %p97, %p98
      %p100 = scmp.ne.s32.totalorder %s86, %s87
      %p101 = scmp.eq.s32.totalorder %s23, 5
      %p102 = por %p100, %p101
      %p104 = scmp.ne.s32.totalorder %s87, %s103
      %p105 = scmp.eq.s32.totalorder %s23, 0
      %p106 = por %p104, %p105
      %s107 = ssub.s32 %s24, %s50
      %s108 = ssub.s32 %s25, %s46
      %s109 = sor.u32 %s107, %s108
      %s110 = ssub.s32 %s26, %s42
      %s111 = sor.u32 %s109, %s110
      %p112 = scmp.eq.s32.totalorder %s111, 0
      %s114 = sadd.s32 %s113, 1
      %s115 = scalar_select %p112, %s113, %s114
      %p118 = pneg %p112
      %p119 = scmp.eq.s32.totalorder %s17, 5
      %p120 = por %p118, %p119
      %p121 = scmp.ne.s32.totalorder %s113, %s116
      %p122 = scmp.eq.s32.totalorder %s17, 0
      %p123 = por %p121, %p122
      %p124 = scmp.ne.s32.totalorder %s113, %s116
      %p125 = scmp.eq.s32.totalorder %s22, 5
      %p126 = por %p124, %p125
      %p127 = scmp.ne.s32.totalorder %s116, %s117
      %p128 = scmp.eq.s32.totalorder %s22, 0
      %p129 = por %p127, %p128
      %p130 = scmp.ne.s32.totalorder %s116, %s117
      %p131 = scmp.eq.s32.totalorder %s23, 5
      %p132 = por %p130, %p131
      %p134 = scmp.ne.s32.totalorder %s117, %s133
      %p135 = scmp.eq.s32.totalorder %s23, 0
      %p136 = por %p134, %p135
      %p137 = scmp.le.s32.totalorder 1, %s17
      %p138 = scmp.lt.s32.totalorder %s17, 7
      %p139 = pnand %p137, %p138
      %p140 = pneg %p139
      // Predicated region
      $region9: #{tpu_custom_call.1} parent=5 // pred_check
        _
      $region10: #{tpu_custom_call.1} parent=5 // pred_check_branch
        %142 = sbr.rel (%p139) target = $region12
      $region11: #{tpu_custom_call.1} parent=5 // pred_region
        %s143 = ssub.s32 %s17, 1
      $region12: #{tpu_custom_call.1} parent=5 // pred_fallthru
        _
      %p144 = scmp.lt.s32.totalorder %s17, 6
      // Predicated region
      $region13: #{tpu_custom_call.1} parent=5 // pred_check
        %p145 = pneg %p144
      $region14: #{tpu_custom_call.1} parent=5 // pred_check_branch
        %147 = sbr.rel (%p145) target = $region16
      $region15: #{tpu_custom_call.1} parent=5 // pred_region
        // Predicated region
        $region17: #{tpu_custom_call.1} parent=15 // pred_check
          %p148 = pneg %p63
        $region18: #{tpu_custom_call.1} parent=15 // pred_check_branch
          %150 = sbr.rel (%p148) target = $region20
        $region19: #{tpu_custom_call.1} parent=15 // pred_region
          %s151 = sand.u32 %s53, 1
          %s152 = scalar_lea.sflag [#allocation3], %s151
          %s153 = sand.u32 %s53, 1
          %s154 = smul.addr %s153, 8
          %s155 = scalar_lea.vmem [#allocation2], %s154
          %s156 = smul.u32 8, %s27
          %158 = vsyncadd %s152, 0
          %s159 = scalar_lea.hbm %s0, %s156
          %s161 = sshll.u32 %s159, 4
          %s162 = int_to_ptr.hbm [resolvable:$true] %s161
          %s163 = sshll.u32 %s155, 4
          %s164 = int_to_ptr.vmem [resolvable:$true] %s163
          %166 = dma.hbm_to_vmem [thread:$0]  %s162, 128, %s164, %s152
        $region20: #{tpu_custom_call.1} parent=15 // pred_fallthru
          _
        // Predicated region
        $region21: #{tpu_custom_call.1} parent=15 // pred_check
          %p167 = pneg %p93
        $region22: #{tpu_custom_call.1} parent=15 // pred_check_branch
          %169 = sbr.rel (%p167) target = $region24
        $region23: #{tpu_custom_call.1} parent=15 // pred_region
          %s170 = sand.u32 %s83, 1
          %s171 = scalar_lea.sflag [#allocation6], %s170
          %s172 = sand.u32 %s83, 1
          %s173 = smul.addr %s172, 2048
          %s174 = scalar_lea.vmem [#allocation5], %s173
          %s175 = smul.u32 128, %s27
          %s176 = smul.u32 2, %s26
          %178 = vsyncadd %s171, 0
          %s179 = smul.addr %s175, 2
          %s180 = sadd.s32 %s176, %s179
          %s181 = smul.addr %s24, 768
          %s182 = sadd.s32 %s180, %s181
          %s183 = smul.addr %s182, 8
          %s184 = scalar_lea.hbm %s1, %s183
          %s185 = sshll.u32 %s184, 4
          %s186 = int_to_ptr.hbm [resolvable:$true] %s185
          %s187 = sshll.u32 %s174, 4
          %s188 = int_to_ptr.vmem [resolvable:$true] %s187
          %193 = dma.hbm_to_vmem [thread:$0]  %s186, 32768, %s188, %s171, 256, 256, 16
        $region24: #{tpu_custom_call.1} parent=15 // pred_fallthru
          _
      $region16: #{tpu_custom_call.1} parent=5 // pred_fallthru
        _
      %p194 = scmp.le.s32.totalorder 1, %s17
      %p195 = scmp.lt.s32.totalorder %s17, 7
      %p196 = pnand %p194, %p195
      %p197 = pneg %p196
      // Predicated region
      $region25: #{tpu_custom_call.1} parent=5 // pred_check
        _
      $region26: #{tpu_custom_call.1} parent=5 // pred_check_branch
        %199 = sbr.rel (%p196) target = $region28
      $region27: #{tpu_custom_call.1} parent=5 // pred_region
        %s200 = ssub.s32 %s17, 1
        %s201 = sand.u32 %s56, 1
        %s202 = scalar_lea.sflag [#allocation3], %s201
        %s203 = sand.u32 %s56, 1
        %s204 = smul.addr %s203, 8
        %s205 = scalar_lea.vmem [#allocation2], %s204
        // Predicated region
        $region29: #{tpu_custom_call.1} parent=27 // pred_check
          %p206 = pneg %p69
        $region30: #{tpu_custom_call.1} parent=27 // pred_check_branch
          %208 = sbr.rel (%p206) target = $region32
        $region31: #{tpu_custom_call.1} parent=27 // pred_region
          %210 = dma.done %s202, 128
        $region32: #{tpu_custom_call.1} parent=27 // pred_fallthru
          _
        %s211 = sand.u32 %s86, 1
        %s212 = scalar_lea.sflag [#allocation6], %s211
        %s213 = sand.u32 %s86, 1
        %s214 = smul.addr %s213, 2048
        %s215 = scalar_lea.vmem [#allocation5], %s214
        // Predicated region
        $region33: #{tpu_custom_call.1} parent=27 // pred_check
          %p216 = pneg %p99
        $region34: #{tpu_custom_call.1} parent=27 // pred_check_branch
          %218 = sbr.rel (%p216) target = $region36
        $region35: #{tpu_custom_call.1} parent=27 // pred_region
          %220 = dma.done %s212, 32768
        $region36: #{tpu_custom_call.1} parent=27 // pred_fallthru
          _
        %s221 = sand.u32 %s56, 1
        %s222 = scalar_lea.sflag [#allocation3], %s221
        %s223 = sand.u32 %s56, 1
        %s224 = smul.addr %s223, 8
        %s225 = scalar_lea.vmem [#allocation2], %s224
        %p226 = pneg %p69
        %p227 = pneg %p66
        %s228 = sand.u32 %s86, 1
        %s229 = scalar_lea.sflag [#allocation6], %s228
        %s230 = sand.u32 %s86, 1
        %s231 = smul.addr %s230, 2048
        %s232 = scalar_lea.vmem [#allocation5], %s231
        %p233 = pneg %p99
        %p234 = pneg %p96
        %p235 = pneg %p129
        %p236 = pneg %p126
        %s237 = sand.u32 %s116, 1
        %s238 = scalar_lea.sflag [#allocation4], %s237
        %s239 = sand.u32 %s116, 1
        %s240 = smul.addr %s239, 32
        %s241 = scalar_lea.vmem [#allocation7], %s240
        %s242 = smul.u32 8, %s31
        %s243 = smul.u32 128, %s31
        %s244 = smul.u32 2, %s30
        %s245 = smul.u32 2, %s29
        %s246 = smul.u32 2, %s30
        %p247 = scmp.eq.s32.totalorder %s31, 0
        // Predicated region
        $region37: #{tpu_custom_call.1} parent=27 // pred_check
          %p248 = pneg %p247
        $region38: #{tpu_custom_call.1} parent=27 // pred_check_branch
          %250 = sbr.rel (%p248) target = $region40
        $region39: #{tpu_custom_call.1} parent=27 // pred_region
          %251 = vst [vmem:[%s241] sm:$0xff] 0.0
          %252 = vst [vmem:[%s241 + $0x8] sm:$0xff] 0.0
          %253 = vst [vmem:[%s241 + $0x10] sm:$0xff] 0.0
          %254 = vst [vmem:[%s241 + $0x18] sm:$0xff] 0.0
        $region40: #{tpu_custom_call.1} parent=27 // pred_fallthru
          _
        %v255 = vlaneseq
        %v256 = vshrl.u32 %v255, 7
        %v257 = vadd.s32 %v256, 8
        %s258 = smul.u32 %s29, 16
        %v259 = vstv %s258
        %v260 = vadd.s32 %v256, %v259
        %v261 = vadd.s32 %v257, %v259
        %v262 = vld [vmem:[%s205] sm:$0xff]
        %v263 = vperm.slane %v262, 0
        %v264 = vperm.slane %v262, 1
        %v265 = vperm.slane %v262, 2
        %v266 = vperm.slane %v262, 3
        %v267 = vperm.slane %v262, 4
        %v268 = vperm.slane %v262, 5
        %v269 = vperm.slane %v262, 6
        %v270 = vperm.slane %v262, 7
        %vm271 = vcmp.eq.s32.totalorder %v260, %v263
        %vm272 = vcmp.eq.s32.totalorder %v260, %v264
        %vm273 = vcmp.eq.s32.totalorder %v260, %v265
        %vm274 = vcmp.eq.s32.totalorder %v260, %v266
        %vm275 = vcmp.eq.s32.totalorder %v260, %v267
        %vm276 = vcmp.eq.s32.totalorder %v260, %v268
        %vm277 = vcmp.eq.s32.totalorder %v260, %v269
        %vm278 = vcmp.eq.s32.totalorder %v260, %v270
        %vm279 = vcmp.eq.s32.totalorder %v261, %v263
        %vm280 = vcmp.eq.s32.totalorder %v261, %v264
        %vm281 = vcmp.eq.s32.totalorder %v261, %v265
        %vm282 = vcmp.eq.s32.totalorder %v261, %v266
        %vm283 = vcmp.eq.s32.totalorder %v261, %v267
        %vm284 = vcmp.eq.s32.totalorder %v261, %v268
        %vm285 = vcmp.eq.s32.totalorder %v261, %v269
        %vm286 = vcmp.eq.s32.totalorder %v261, %v270
        %v287 = vsel %vm271, 1, 0
        %v288 = vsel %vm272, 1, 0
        %v289 = vsel %vm273, 1, 0
        %v290 = vsel %vm274, 1, 0
        %v291 = vsel %vm275, 1, 0
        %v292 = vsel %vm276, 1, 0
        %v293 = vsel %vm277, 1, 0
        %v294 = vsel %vm278, 1, 0
        %v295 = vsel %vm279, 1, 0
        %v296 = vsel %vm280, 1, 0
        %v297 = vsel %vm281, 1, 0
        %v298 = vsel %vm282, 1, 0
        %v299 = vsel %vm283, 1, 0
        %v300 = vsel %vm284, 1, 0
        %v301 = vsel %vm285, 1, 0
        %v302 = vsel %vm286, 1, 0
        %v303 = vcvt.s32.f32 %v287
        %v304 = vcvt.s32.f32 %v288
        %v305 = vcvt.s32.f32 %v289
        %v306 = vcvt.s32.f32 %v290
        %v307 = vcvt.s32.f32 %v291
        %v308 = vcvt.s32.f32 %v292
        %v309 = vcvt.s32.f32 %v293
        %v310 = vcvt.s32.f32 %v294
        %v311 = vcvt.s32.f32 %v295
        %v312 = vcvt.s32.f32 %v296
        %v313 = vcvt.s32.f32 %v297
        %v314 = vcvt.s32.f32 %v298
        %v315 = vcvt.s32.f32 %v299
        %v316 = vcvt.s32.f32 %v300
        %v317 = vcvt.s32.f32 %v301
        %v318 = vcvt.s32.f32 %v302
        %v319 = vld [vmem:[%s241] sm:$0xff]
        %v320 = vld [vmem:[%s241 + $0x8] sm:$0xff]
        %v321 = vld [vmem:[%s241 + $0x10] sm:$0xff]
        %v322 = vld [vmem:[%s241 + $0x18] sm:$0xff]
        %v323 = vld [vmem:[%s215] sm:$0xff]
        %v324 = vld [vmem:[%s215 + $0x8] sm:$0xff]
        %v325 = vld [vmem:[%s215 + $0x10] sm:$0xff]
        %v326 = vld [vmem:[%s215 + $0x18] sm:$0xff]
        %v327 = vld [vmem:[%s215 + $0x20] sm:$0xff]
        %v328 = vld [vmem:[%s215 + $0x28] sm:$0xff]
        %v329 = vld [vmem:[%s215 + $0x30] sm:$0xff]
        %v330 = vld [vmem:[%s215 + $0x38] sm:$0xff]
        %v331 = vld [vmem:[%s215 + $0x40] sm:$0xff]
        %v332 = vld [vmem:[%s215 + $0x48] sm:$0xff]
        %v333 = vld [vmem:[%s215 + $0x50] sm:$0xff]
        %v334 = vld [vmem:[%s215 + $0x58] sm:$0xff]
        %v335 = vld [vmem:[%s215 + $0x60] sm:$0xff]
        %v336 = vld [vmem:[%s215 + $0x68] sm:$0xff]
        %v337 = vld [vmem:[%s215 + $0x70] sm:$0xff]
        %v338 = vld [vmem:[%s215 + $0x78] sm:$0xff]
        %v339 = vld [vmem:[%s215 + $0x80] sm:$0xff]
        %v340 = vld [vmem:[%s215 + $0x88] sm:$0xff]
        %v341 = vld [vmem:[%s215 + $0x90] sm:$0xff]
        %v342 = vld [vmem:[%s215 + $0x98] sm:$0xff]
        %v343 = vld [vmem:[%s215 + $0xa0] sm:$0xff]
        %v344 = vld [vmem:[%s215 + $0xa8] sm:$0xff]
        %v345 = vld [vmem:[%s215 + $0xb0] sm:$0xff]
        %v346 = vld [vmem:[%s215 + $0xb8] sm:$0xff]
        %v347 = vld [vmem:[%s215 + $0xc0] sm:$0xff]
        %v348 = vld [vmem:[%s215 + $0xc8] sm:$0xff]
        %v349 = vld [vmem:[%s215 + $0xd0] sm:$0xff]
        %v350 = vld [vmem:[%s215 + $0xd8] sm:$0xff]
        %v351 = vld [vmem:[%s215 + $0xe0] sm:$0xff]
        %v352 = vld [vmem:[%s215 + $0xe8] sm:$0xff]
        %v353 = vld [vmem:[%s215 + $0xf0] sm:$0xff]
        %v354 = vld [vmem:[%s215 + $0xf8] sm:$0xff]
        %v355 = vld [vmem:[%s215 + $0x100] sm:$0xff]
        %v356 = vld [vmem:[%s215 + $0x108] sm:$0xff]
        %v357 = vld [vmem:[%s215 + $0x110] sm:$0xff]
        %v358 = vld [vmem:[%s215 + $0x118] sm:$0xff]
        %v359 = vld [vmem:[%s215 + $0x120] sm:$0xff]
        %v360 = vld [vmem:[%s215 + $0x128] sm:$0xff]
        %v361 = vld [vmem:[%s215 + $0x130] sm:$0xff]
        %v362 = vld [vmem:[%s215 + $0x138] sm:$0xff]
        %v363 = vld [vmem:[%s215 + $0x140] sm:$0xff]
        %v364 = vld [vmem:[%s215 + $0x148] sm:$0xff]
        %v365 = vld [vmem:[%s215 + $0x150] sm:$0xff]
        %v366 = vld [vmem:[%s215 + $0x158] sm:$0xff]
        %v367 = vld [vmem:[%s215 + $0x160] sm:$0xff]
        %v368 = vld [vmem:[%s215 + $0x168] sm:$0xff]
        %v369 = vld [vmem:[%s215 + $0x170] sm:$0xff]
        %v370 = vld [vmem:[%s215 + $0x178] sm:$0xff]
        %v371 = vld [vmem:[%s215 + $0x180] sm:$0xff]
        %v372 = vld [vmem:[%s215 + $0x188] sm:$0xff]
        %v373 = vld [vmem:[%s215 + $0x190] sm:$0xff]
        %v374 = vld [vmem:[%s215 + $0x198] sm:$0xff]
        %v375 = vld [vmem:[%s215 + $0x1a0] sm:$0xff]
        %v376 = vld [vmem:[%s215 + $0x1a8] sm:$0xff]
        %v377 = vld [vmem:[%s215 + $0x1b0] sm:$0xff]
        %v378 = vld [vmem:[%s215 + $0x1b8] sm:$0xff]
        %v379 = vld [vmem:[%s215 + $0x1c0] sm:$0xff]
        %v380 = vld [vmem:[%s215 + $0x1c8] sm:$0xff]
        %v381 = vld [vmem:[%s215 + $0x1d0] sm:$0xff]
        %v382 = vld [vmem:[%s215 + $0x1d8] sm:$0xff]
        %v383 = vld [vmem:[%s215 + $0x1e0] sm:$0xff]
        %v384 = vld [vmem:[%s215 + $0x1e8] sm:$0xff]
        %v385 = vld [vmem:[%s215 + $0x1f0] sm:$0xff]
        %v386 = vld [vmem:[%s215 + $0x1f8] sm:$0xff]
        %v387 = vld [vmem:[%s215 + $0x200] sm:$0xff]
        %v388 = vld [vmem:[%s215 + $0x208] sm:$0xff]
        %v389 = vld [vmem:[%s215 + $0x210] sm:$0xff]
        %v390 = vld [vmem:[%s215 + $0x218] sm:$0xff]
        %v391 = vld [vmem:[%s215 + $0x220] sm:$0xff]
        %v392 = vld [vmem:[%s215 + $0x228] sm:$0xff]
        %v393 = vld [vmem:[%s215 + $0x230] sm:$0xff]
        %v394 = vld [vmem:[%s215 + $0x238] sm:$0xff]
        %v395 = vld [vmem:[%s215 + $0x240] sm:$0xff]
        %v396 = vld [vmem:[%s215 + $0x248] sm:$0xff]
        %v397 = vld [vmem:[%s215 + $0x250] sm:$0xff]
        %v398 = vld [vmem:[%s215 + $0x258] sm:$0xff]
        %v399 = vld [vmem:[%s215 + $0x260] sm:$0xff]
        %v400 = vld [vmem:[%s215 + $0x268] sm:$0xff]
        %v401 = vld [vmem:[%s215 + $0x270] sm:$0xff]
        %v402 = vld [vmem:[%s215 + $0x278] sm:$0xff]
        %v403 = vld [vmem:[%s215 + $0x280] sm:$0xff]
        %v404 = vld [vmem:[%s215 + $0x288] sm:$0xff]
        %v405 = vld [vmem:[%s215 + $0x290] sm:$0xff]
        %v406 = vld [vmem:[%s215 + $0x298] sm:$0xff]
        %v407 = vld [vmem:[%s215 + $0x2a0] sm:$0xff]
        %v408 = vld [vmem:[%s215 + $0x2a8] sm:$0xff]
        %v409 = vld [vmem:[%s215 + $0x2b0] sm:$0xff]
        %v410 = vld [vmem:[%s215 + $0x2b8] sm:$0xff]
        %v411 = vld [vmem:[%s215 + $0x2c0] sm:$0xff]
        %v412 = vld [vmem:[%s215 + $0x2c8] sm:$0xff]
        %v413 = vld [vmem:[%s215 + $0x2d0] sm:$0xff]
        %v414 = vld [vmem:[%s215 + $0x2d8] sm:$0xff]
        %v415 = vld [vmem:[%s215 + $0x2e0] sm:$0xff]
        %v416 = vld [vmem:[%s215 + $0x2e8] sm:$0xff]
        %v417 = vld [vmem:[%s215 + $0x2f0] sm:$0xff]
        %v418 = vld [vmem:[%s215 + $0x2f8] sm:$0xff]
        %v419 = vld [vmem:[%s215 + $0x300] sm:$0xff]
        %v420 = vld [vmem:[%s215 + $0x308] sm:$0xff]
        %v421 = vld [vmem:[%s215 + $0x310] sm:$0xff]
        %v422 = vld [vmem:[%s215 + $0x318] sm:$0xff]
        %v423 = vld [vmem:[%s215 + $0x320] sm:$0xff]
        %v424 = vld [vmem:[%s215 + $0x328] sm:$0xff]
        %v425 = vld [vmem:[%s215 + $0x330] sm:$0xff]
        %v426 = vld [vmem:[%s215 + $0x338] sm:$0xff]
        %v427 = vld [vmem:[%s215 + $0x340] sm:$0xff]
        %v428 = vld [vmem:[%s215 + $0x348] sm:$0xff]
        %v429 = vld [vmem:[%s215 + $0x350] sm:$0xff]
        %v430 = vld [vmem:[%s215 + $0x358] sm:$0xff]
        %v431 = vld [vmem:[%s215 + $0x360] sm:$0xff]
        %v432 = vld [vmem:[%s215 + $0x368] sm:$0xff]
        %v433 = vld [vmem:[%s215 + $0x370] sm:$0xff]
        %v434 = vld [vmem:[%s215 + $0x378] sm:$0xff]
        %v435 = vld [vmem:[%s215 + $0x380] sm:$0xff]
        %v436 = vld [vmem:[%s215 + $0x388] sm:$0xff]
        %v437 = vld [vmem:[%s215 + $0x390] sm:$0xff]
        %v438 = vld [vmem:[%s215 + $0x398] sm:$0xff]
        %v439 = vld [vmem:[%s215 + $0x3a0] sm:$0xff]
        %v440 = vld [vmem:[%s215 + $0x3a8] sm:$0xff]
        %v441 = vld [vmem:[%s215 + $0x3b0] sm:$0xff]
        %v442 = vld [vmem:[%s215 + $0x3b8] sm:$0xff]
        %v443 = vld [vmem:[%s215 + $0x3c0] sm:$0xff]
        %v444 = vld [vmem:[%s215 + $0x3c8] sm:$0xff]
        %v445 = vld [vmem:[%s215 + $0x3d0] sm:$0xff]
        %v446 = vld [vmem:[%s215 + $0x3d8] sm:$0xff]
        %v447 = vld [vmem:[%s215 + $0x3e0] sm:$0xff]
        %v448 = vld [vmem:[%s215 + $0x3e8] sm:$0xff]
        %v449 = vld [vmem:[%s215 + $0x3f0] sm:$0xff]
        %v450 = vld [vmem:[%s215 + $0x3f8] sm:$0xff]
        %v451 = vld [vmem:[%s215 + $0x400] sm:$0xff]
        %v452 = vld [vmem:[%s215 + $0x408] sm:$0xff]
        %v453 = vld [vmem:[%s215 + $0x410] sm:$0xff]
        %v454 = vld [vmem:[%s215 + $0x418] sm:$0xff]
        %v455 = vld [vmem:[%s215 + $0x420] sm:$0xff]
        %v456 = vld [vmem:[%s215 + $0x428] sm:$0xff]
        %v457 = vld [vmem:[%s215 + $0x430] sm:$0xff]
        %v458 = vld [vmem:[%s215 + $0x438] sm:$0xff]
        %v459 = vld [vmem:[%s215 + $0x440] sm:$0xff]
        %v460 = vld [vmem:[%s215 + $0x448] sm:$0xff]
        %v461 = vld [vmem:[%s215 + $0x450] sm:$0xff]
        %v462 = vld [vmem:[%s215 + $0x458] sm:$0xff]
        %v463 = vld [vmem:[%s215 + $0x460] sm:$0xff]
        %v464 = vld [vmem:[%s215 + $0x468] sm:$0xff]
        %v465 = vld [vmem:[%s215 + $0x470] sm:$0xff]
        %v466 = vld [vmem:[%s215 + $0x478] sm:$0xff]
        %v467 = vld [vmem:[%s215 + $0x480] sm:$0xff]
        %v468 = vld [vmem:[%s215 + $0x488] sm:$0xff]
        %v469 = vld [vmem:[%s215 + $0x490] sm:$0xff]
        %v470 = vld [vmem:[%s215 + $0x498] sm:$0xff]
        %v471 = vld [vmem:[%s215 + $0x4a0] sm:$0xff]
        %v472 = vld [vmem:[%s215 + $0x4a8] sm:$0xff]
        %v473 = vld [vmem:[%s215 + $0x4b0] sm:$0xff]
        %v474 = vld [vmem:[%s215 + $0x4b8] sm:$0xff]
        %v475 = vld [vmem:[%s215 + $0x4c0] sm:$0xff]
        %v476 = vld [vmem:[%s215 + $0x4c8] sm:$0xff]
        %v477 = vld [vmem:[%s215 + $0x4d0] sm:$0xff]
        %v478 = vld [vmem:[%s215 + $0x4d8] sm:$0xff]
        %v479 = vld [vmem:[%s215 + $0x4e0] sm:$0xff]
        %v480 = vld [vmem:[%s215 + $0x4e8] sm:$0xff]
        %v481 = vld [vmem:[%s215 + $0x4f0] sm:$0xff]
        %v482 = vld [vmem:[%s215 + $0x4f8] sm:$0xff]
        %v483 = vld [vmem:[%s215 + $0x500] sm:$0xff]
        %v484 = vld [vmem:[%s215 + $0x508] sm:$0xff]
        %v485 = vld [vmem:[%s215 + $0x510] sm:$0xff]
        %v486 = vld [vmem:[%s215 + $0x518] sm:$0xff]
        %v487 = vld [vmem:[%s215 + $0x520] sm:$0xff]
        %v488 = vld [vmem:[%s215 + $0x528] sm:$0xff]
        %v489 = vld [vmem:[%s215 + $0x530] sm:$0xff]
        %v490 = vld [vmem:[%s215 + $0x538] sm:$0xff]
        %v491 = vld [vmem:[%s215 + $0x540] sm:$0xff]
        %v492 = vld [vmem:[%s215 + $0x548] sm:$0xff]
        %v493 = vld [vmem:[%s215 + $0x550] sm:$0xff]
        %v494 = vld [vmem:[%s215 + $0x558] sm:$0xff]
        %v495 = vld [vmem:[%s215 + $0x560] sm:$0xff]
        %v496 = vld [vmem:[%s215 + $0x568] sm:$0xff]
        %v497 = vld [vmem:[%s215 + $0x570] sm:$0xff]
        %v498 = vld [vmem:[%s215 + $0x578] sm:$0xff]
        %v499 = vld [vmem:[%s215 + $0x580] sm:$0xff]
        %v500 = vld [vmem:[%s215 + $0x588] sm:$0xff]
        %v501 = vld [vmem:[%s215 + $0x590] sm:$0xff]
        %v502 = vld [vmem:[%s215 + $0x598] sm:$0xff]
        %v503 = vld [vmem:[%s215 + $0x5a0] sm:$0xff]
        %v504 = vld [vmem:[%s215 + $0x5a8] sm:$0xff]
        %v505 = vld [vmem:[%s215 + $0x5b0] sm:$0xff]
        %v506 = vld [vmem:[%s215 + $0x5b8] sm:$0xff]
        %v507 = vld [vmem:[%s215 + $0x5c0] sm:$0xff]
        %v508 = vld [vmem:[%s215 + $0x5c8] sm:$0xff]
        %v509 = vld [vmem:[%s215 + $0x5d0] sm:$0xff]
        %v510 = vld [vmem:[%s215 + $0x5d8] sm:$0xff]
        %v511 = vld [vmem:[%s215 + $0x5e0] sm:$0xff]
        %v512 = vld [vmem:[%s215 + $0x5e8] sm:$0xff]
        %v513 = vld [vmem:[%s215 + $0x5f0] sm:$0xff]
        %v514 = vld [vmem:[%s215 + $0x5f8] sm:$0xff]
        %v515 = vld [vmem:[%s215 + $0x600] sm:$0xff]
        %v516 = vld [vmem:[%s215 + $0x608] sm:$0xff]
        %v517 = vld [vmem:[%s215 + $0x610] sm:$0xff]
        %v518 = vld [vmem:[%s215 + $0x618] sm:$0xff]
        %v519 = vld [vmem:[%s215 + $0x620] sm:$0xff]
        %v520 = vld [vmem:[%s215 + $0x628] sm:$0xff]
        %v521 = vld [vmem:[%s215 + $0x630] sm:$0xff]
        %v522 = vld [vmem:[%s215 + $0x638] sm:$0xff]
        %v523 = vld [vmem:[%s215 + $0x640] sm:$0xff]
        %v524 = vld [vmem:[%s215 + $0x648] sm:$0xff]
        %v525 = vld [vmem:[%s215 + $0x650] sm:$0xff]
        %v526 = vld [vmem:[%s215 + $0x658] sm:$0xff]
        %v527 = vld [vmem:[%s215 + $0x660] sm:$0xff]
        %v528 = vld [vmem:[%s215 + $0x668] sm:$0xff]
        %v529 = vld [vmem:[%s215 + $0x670] sm:$0xff]
        %v530 = vld [vmem:[%s215 + $0x678] sm:$0xff]
        %v531 = vld [vmem:[%s215 + $0x680] sm:$0xff]
        %v532 = vld [vmem:[%s215 + $0x688] sm:$0xff]
        %v533 = vld [vmem:[%s215 + $0x690] sm:$0xff]
        %v534 = vld [vmem:[%s215 + $0x698] sm:$0xff]
        %v535 = vld [vmem:[%s215 + $0x6a0] sm:$0xff]
        %v536 = vld [vmem:[%s215 + $0x6a8] sm:$0xff]
        %v537 = vld [vmem:[%s215 + $0x6b0] sm:$0xff]
        %v538 = vld [vmem:[%s215 + $0x6b8] sm:$0xff]
        %v539 = vld [vmem:[%s215 + $0x6c0] sm:$0xff]
        %v540 = vld [vmem:[%s215 + $0x6c8] sm:$0xff]
        %v541 = vld [vmem:[%s215 + $0x6d0] sm:$0xff]
        %v542 = vld [vmem:[%s215 + $0x6d8] sm:$0xff]
        %v543 = vld [vmem:[%s215 + $0x6e0] sm:$0xff]
        %v544 = vld [vmem:[%s215 + $0x6e8] sm:$0xff]
        %v545 = vld [vmem:[%s215 + $0x6f0] sm:$0xff]
        %v546 = vld [vmem:[%s215 + $0x6f8] sm:$0xff]
        %v547 = vld [vmem:[%s215 + $0x700] sm:$0xff]
        %v548 = vld [vmem:[%s215 + $0x708] sm:$0xff]
        %v549 = vld [vmem:[%s215 + $0x710] sm:$0xff]
        %v550 = vld [vmem:[%s215 + $0x718] sm:$0xff]
        %v551 = vld [vmem:[%s215 + $0x720] sm:$0xff]
        %v552 = vld [vmem:[%s215 + $0x728] sm:$0xff]
        %v553 = vld [vmem:[%s215 + $0x730] sm:$0xff]
        %v554 = vld [vmem:[%s215 + $0x738] sm:$0xff]
        %v555 = vld [vmem:[%s215 + $0x740] sm:$0xff]
        %v556 = vld [vmem:[%s215 + $0x748] sm:$0xff]
        %v557 = vld [vmem:[%s215 + $0x750] sm:$0xff]
        %v558 = vld [vmem:[%s215 + $0x758] sm:$0xff]
        %v559 = vld [vmem:[%s215 + $0x760] sm:$0xff]
        %v560 = vld [vmem:[%s215 + $0x768] sm:$0xff]
        %v561 = vld [vmem:[%s215 + $0x770] sm:$0xff]
        %v562 = vld [vmem:[%s215 + $0x778] sm:$0xff]
        %v563 = vld [vmem:[%s215 + $0x780] sm:$0xff]
        %v564 = vld [vmem:[%s215 + $0x788] sm:$0xff]
        %v565 = vld [vmem:[%s215 + $0x790] sm:$0xff]
        %v566 = vld [vmem:[%s215 + $0x798] sm:$0xff]
        %v567 = vld [vmem:[%s215 + $0x7a0] sm:$0xff]
        %v568 = vld [vmem:[%s215 + $0x7a8] sm:$0xff]
        %v569 = vld [vmem:[%s215 + $0x7b0] sm:$0xff]
        %v570 = vld [vmem:[%s215 + $0x7b8] sm:$0xff]
        %v571 = vld [vmem:[%s215 + $0x7c0] sm:$0xff]
        %v572 = vld [vmem:[%s215 + $0x7c8] sm:$0xff]
        %v573 = vld [vmem:[%s215 + $0x7d0] sm:$0xff]
        %v574 = vld [vmem:[%s215 + $0x7d8] sm:$0xff]
        %v575 = vld [vmem:[%s215 + $0x7e0] sm:$0xff]
        %v576 = vld [vmem:[%s215 + $0x7e8] sm:$0xff]
        %v577 = vld [vmem:[%s215 + $0x7f0] sm:$0xff]
        %v578 = vld [vmem:[%s215 + $0x7f8] sm:$0xff]
        %579 = vmatpush.msra.mxu0 %v353
        %580 = vmatpush.msra.mxu0 %v351
        %581 = vmatpush.msra.mxu0 %v349
        %582 = vmatpush.msra.mxu0 %v347
        %583 = vmatpush.msra.mxu0 %v345
        %584 = vmatpush.msra.mxu0 %v343
        %585 = vmatpush.msra.mxu0 %v341
        %586 = vmatpush.msra.mxu0 %v339
        %587 = vmatpush.msra.mxu0 %v337
        %588 = vmatpush.msra.mxu0 %v335
        %589 = vmatpush.msra.mxu0 %v333
        %590 = vmatpush.msra.mxu0 %v331
        %591 = vmatpush.msra.mxu0 %v329
        %592 = vmatpush.msra.mxu0 %v327
        %593 = vmatpush.msra.mxu0 %v325
        %594 = vmatpush.msra.mxu0 %v323
        %595 = vmatmul.f32.gmra.mxu0 %v303
        %v596 = vpop.f32.mrf.mxu0
        %v597 = vadd.f32 0.0, %v596
        %598 = vmatmul.f32.gmra.mxu0 %v311
        %v599 = vpop.f32.mrf.mxu0
        %v600 = vadd.f32 0.0, %v599
        %601 = vdwg.mxu0
        %602 = vmatpush.msra.mxu0 %v385
        %603 = vmatpush.msra.mxu0 %v383
        %604 = vmatpush.msra.mxu0 %v381
        %605 = vmatpush.msra.mxu0 %v379
        %606 = vmatpush.msra.mxu0 %v377
        %607 = vmatpush.msra.mxu0 %v375
        %608 = vmatpush.msra.mxu0 %v373
        %609 = vmatpush.msra.mxu0 %v371
        %610 = vmatpush.msra.mxu0 %v369
        %611 = vmatpush.msra.mxu0 %v367
        %612 = vmatpush.msra.mxu0 %v365
        %613 = vmatpush.msra.mxu0 %v363
        %614 = vmatpush.msra.mxu0 %v361
        %615 = vmatpush.msra.mxu0 %v359
        %616 = vmatpush.msra.mxu0 %v357
        %617 = vmatpush.msra.mxu0 %v355
        %618 = vmatmul.f32.gmra.mxu0 %v304
        %v619 = vpop.f32.mrf.mxu0
        %v620 = vadd.f32 %v597, %v619
        %621 = vmatmul.f32.gmra.mxu0 %v312
        %v622 = vpop.f32.mrf.mxu0
        %v623 = vadd.f32 %v600, %v622
        %624 = vdwg.mxu0
        %625 = vmatpush.msra.mxu0 %v417
        %626 = vmatpush.msra.mxu0 %v415
        %627 = vmatpush.msra.mxu0 %v413
        %628 = vmatpush.msra.mxu0 %v411
        %629 = vmatpush.msra.mxu0 %v409
        %630 = vmatpush.msra.mxu0 %v407
        %631 = vmatpush.msra.mxu0 %v405
        %632 = vmatpush.msra.mxu0 %v403
        %633 = vmatpush.msra.mxu0 %v401
        %634 = vmatpush.msra.mxu0 %v399
        %635 = vmatpush.msra.mxu0 %v397
        %636 = vmatpush.msra.mxu0 %v395
        %637 = vmatpush.msra.mxu0 %v393
        %638 = vmatpush.msra.mxu0 %v391
        %639 = vmatpush.msra.mxu0 %v389
        %640 = vmatpush.msra.mxu0 %v387
        %641 = vmatmul.f32.gmra.mxu0 %v305
        %v642 = vpop.f32.mrf.mxu0
        %v643 = vadd.f32 %v620, %v642
        %644 = vmatmul.f32.gmra.mxu0 %v313
        %v645 = vpop.f32.mrf.mxu0
        %v646 = vadd.f32 %v623, %v645
        %647 = vdwg.mxu0
        %648 = vmatpush.msra.mxu0 %v449
        %649 = vmatpush.msra.mxu0 %v447
        %650 = vmatpush.msra.mxu0 %v445
        %651 = vmatpush.msra.mxu0 %v443
        %652 = vmatpush.msra.mxu0 %v441
        %653 = vmatpush.msra.mxu0 %v439
        %654 = vmatpush.msra.mxu0 %v437
        %655 = vmatpush.msra.mxu0 %v435
        %656 = vmatpush.msra.mxu0 %v433
        %657 = vmatpush.msra.mxu0 %v431
        %658 = vmatpush.msra.mxu0 %v429
        %659 = vmatpush.msra.mxu0 %v427
        %660 = vmatpush.msra.mxu0 %v425
        %661 = vmatpush.msra.mxu0 %v423
        %662 = vmatpush.msra.mxu0 %v421
        %663 = vmatpush.msra.mxu0 %v419
        %664 = vmatmul.f32.gmra.mxu0 %v306
        %v665 = vpop.f32.mrf.mxu0
        %v666 = vadd.f32 %v643, %v665
        %667 = vmatmul.f32.gmra.mxu0 %v314
        %v668 = vpop.f32.mrf.mxu0
        %v669 = vadd.f32 %v646, %v668
        %670 = vdwg.mxu0
        %671 = vmatpush.msra.mxu0 %v481
        %672 = vmatpush.msra.mxu0 %v479
        %673 = vmatpush.msra.mxu0 %v477
        %674 = vmatpush.msra.mxu0 %v475
        %675 = vmatpush.msra.mxu0 %v473
        %676 = vmatpush.msra.mxu0 %v471
        %677 = vmatpush.msra.mxu0 %v469
        %678 = vmatpush.msra.mxu0 %v467
        %679 = vmatpush.msra.mxu0 %v465
        %680 = vmatpush.msra.mxu0 %v463
        %681 = vmatpush.msra.mxu0 %v461
        %682 = vmatpush.msra.mxu0 %v459
        %683 = vmatpush.msra.mxu0 %v457
        %684 = vmatpush.msra.mxu0 %v455
        %685 = vmatpush.msra.mxu0 %v453
        %686 = vmatpush.msra.mxu0 %v451
        %687 = vmatmul.f32.gmra.mxu0 %v307
        %v688 = vpop.f32.mrf.mxu0
        %v689 = vadd.f32 %v666, %v688
        %690 = vmatmul.f32.gmra.mxu0 %v315
        %v691 = vpop.f32.mrf.mxu0
        %v692 = vadd.f32 %v669, %v691
        %693 = vdwg.mxu0
        %694 = vmatpush.msra.mxu0 %v513
        %695 = vmatpush.msra.mxu0 %v511
        %696 = vmatpush.msra.mxu0 %v509
        %697 = vmatpush.msra.mxu0 %v507
        %698 = vmatpush.msra.mxu0 %v505
        %699 = vmatpush.msra.mxu0 %v503
        %700 = vmatpush.msra.mxu0 %v501
        %701 = vmatpush.msra.mxu0 %v499
        %702 = vmatpush.msra.mxu0 %v497
        %703 = vmatpush.msra.mxu0 %v495
        %704 = vmatpush.msra.mxu0 %v493
        %705 = vmatpush.msra.mxu0 %v491
        %706 = vmatpush.msra.mxu0 %v489
        %707 = vmatpush.msra.mxu0 %v487
        %708 = vmatpush.msra.mxu0 %v485
        %709 = vmatpush.msra.mxu0 %v483
        %710 = vmatmul.f32.gmra.mxu0 %v308
        %v711 = vpop.f32.mrf.mxu0
        %v712 = vadd.f32 %v689, %v711
        %713 = vmatmul.f32.gmra.mxu0 %v316
        %v714 = vpop.f32.mrf.mxu0
        %v715 = vadd.f32 %v692, %v714
        %716 = vdwg.mxu0
        %717 = vmatpush.msra.mxu0 %v545
        %718 = vmatpush.msra.mxu0 %v543
        %719 = vmatpush.msra.mxu0 %v541
        %720 = vmatpush.msra.mxu0 %v539
        %721 = vmatpush.msra.mxu0 %v537
        %722 = vmatpush.msra.mxu0 %v535
        %723 = vmatpush.msra.mxu0 %v533
        %724 = vmatpush.msra.mxu0 %v531
        %725 = vmatpush.msra.mxu0 %v529
        %726 = vmatpush.msra.mxu0 %v527
        %727 = vmatpush.msra.mxu0 %v525
        %728 = vmatpush.msra.mxu0 %v523
        %729 = vmatpush.msra.mxu0 %v521
        %730 = vmatpush.msra.mxu0 %v519
        %731 = vmatpush.msra.mxu0 %v517
        %732 = vmatpush.msra.mxu0 %v515
        %733 = vmatmul.f32.gmra.mxu0 %v309
        %v734 = vpop.f32.mrf.mxu0
        %v735 = vadd.f32 %v712, %v734
        %736 = vmatmul.f32.gmra.mxu0 %v317
        %v737 = vpop.f32.mrf.mxu0
        %v738 = vadd.f32 %v715, %v737
        %739 = vdwg.mxu0
        %740 = vmatpush.msra.mxu0 %v577
        %741 = vmatpush.msra.mxu0 %v575
        %742 = vmatpush.msra.mxu0 %v573
        %743 = vmatpush.msra.mxu0 %v571
        %744 = vmatpush.msra.mxu0 %v569
        %745 = vmatpush.msra.mxu0 %v567
        %746 = vmatpush.msra.mxu0 %v565
        %747 = vmatpush.msra.mxu0 %v563
        %748 = vmatpush.msra.mxu0 %v561
        %749 = vmatpush.msra.mxu0 %v559
        %750 = vmatpush.msra.mxu0 %v557
        %751 = vmatpush.msra.mxu0 %v555
        %752 = vmatpush.msra.mxu0 %v553
        %753 = vmatpush.msra.mxu0 %v551
        %754 = vmatpush.msra.mxu0 %v549
        %755 = vmatpush.msra.mxu0 %v547
        %756 = vmatmul.f32.gmra.mxu0 %v310
        %v757 = vpop.f32.mrf.mxu0
        %v758 = vadd.f32 %v735, %v757
        %759 = vmatmul.f32.gmra.mxu0 %v318
        %v760 = vpop.f32.mrf.mxu0
        %v761 = vadd.f32 %v738, %v760
        %762 = vdwg.mxu0
        %763 = vmatpush.msra.mxu0 %v354
        %764 = vmatpush.msra.mxu0 %v352
        %765 = vmatpush.msra.mxu0 %v350
        %766 = vmatpush.msra.mxu0 %v348
        %767 = vmatpush.msra.mxu0 %v346
        %768 = vmatpush.msra.mxu0 %v344
        %769 = vmatpush.msra.mxu0 %v342
        %770 = vmatpush.msra.mxu0 %v340
        %771 = vmatpush.msra.mxu0 %v338
        %772 = vmatpush.msra.mxu0 %v336
        %773 = vmatpush.msra.mxu0 %v334
        %774 = vmatpush.msra.mxu0 %v332
        %775 = vmatpush.msra.mxu0 %v330
        %776 = vmatpush.msra.mxu0 %v328
        %777 = vmatpush.msra.mxu0 %v326
        %778 = vmatpush.msra.mxu0 %v324
        %779 = vmatmul.f32.gmra.mxu0 %v303
        %v780 = vpop.f32.mrf.mxu0
        %v781 = vadd.f32 0.0, %v780
        %782 = vmatmul.f32.gmra.mxu0 %v311
        %v783 = vpop.f32.mrf.mxu0
        %v784 = vadd.f32 0.0, %v783
        %785 = vdwg.mxu0
        %786 = vmatpush.msra.mxu0 %v386
        %787 = vmatpush.msra.mxu0 %v384
        %788 = vmatpush.msra.mxu0 %v382
        %789 = vmatpush.msra.mxu0 %v380
        %790 = vmatpush.msra.mxu0 %v378
        %791 = vmatpush.msra.mxu0 %v376
        %792 = vmatpush.msra.mxu0 %v374
        %793 = vmatpush.msra.mxu0 %v372
        %794 = vmatpush.msra.mxu0 %v370
        %795 = vmatpush.msra.mxu0 %v368
        %796 = vmatpush.msra.mxu0 %v366
        %797 = vmatpush.msra.mxu0 %v364
        %798 = vmatpush.msra.mxu0 %v362
        %799 = vmatpush.msra.mxu0 %v360
        %800 = vmatpush.msra.mxu0 %v358
        %801 = vmatpush.msra.mxu0 %v356
        %802 = vmatmul.f32.gmra.mxu0 %v304
        %v803 = vpop.f32.mrf.mxu0
        %v804 = vadd.f32 %v781, %v803
        %805 = vmatmul.f32.gmra.mxu0 %v312
        %v806 = vpop.f32.mrf.mxu0
        %v807 = vadd.f32 %v784, %v806
        %808 = vdwg.mxu0
        %809 = vmatpush.msra.mxu0 %v418
        %810 = vmatpush.msra.mxu0 %v416
        %811 = vmatpush.msra.mxu0 %v414
        %812 = vmatpush.msra.mxu0 %v412
        %813 = vmatpush.msra.mxu0 %v410
        %814 = vmatpush.msra.mxu0 %v408
        %815 = vmatpush.msra.mxu0 %v406
        %816 = vmatpush.msra.mxu0 %v404
        %817 = vmatpush.msra.mxu0 %v402
        %818 = vmatpush.msra.mxu0 %v400
        %819 = vmatpush.msra.mxu0 %v398
        %820 = vmatpush.msra.mxu0 %v396
        %821 = vmatpush.msra.mxu0 %v394
        %822 = vmatpush.msra.mxu0 %v392
        %823 = vmatpush.msra.mxu0 %v390
        %824 = vmatpush.msra.mxu0 %v388
        %825 = vmatmul.f32.gmra.mxu0 %v305
        %v826 = vpop.f32.mrf.mxu0
        %v827 = vadd.f32 %v804, %v826
        %828 = vmatmul.f32.gmra.mxu0 %v313
        %v829 = vpop.f32.mrf.mxu0
        %v830 = vadd.f32 %v807, %v829
        %831 = vdwg.mxu0
        %832 = vmatpush.msra.mxu0 %v450
        %833 = vmatpush.msra.mxu0 %v448
        %834 = vmatpush.msra.mxu0 %v446
        %835 = vmatpush.msra.mxu0 %v444
        %836 = vmatpush.msra.mxu0 %v442
        %837 = vmatpush.msra.mxu0 %v440
        %838 = vmatpush.msra.mxu0 %v438
        %839 = vmatpush.msra.mxu0 %v436
        %840 = vmatpush.msra.mxu0 %v434
        %841 = vmatpush.msra.mxu0 %v432
        %842 = vmatpush.msra.mxu0 %v430
        %843 = vmatpush.msra.mxu0 %v428
        %844 = vmatpush.msra.mxu0 %v426
        %845 = vmatpush.msra.mxu0 %v424
        %846 = vmatpush.msra.mxu0 %v422
        %847 = vmatpush.msra.mxu0 %v420
        %848 = vmatmul.f32.gmra.mxu0 %v306
        %v849 = vpop.f32.mrf.mxu0
        %v850 = vadd.f32 %v827, %v849
        %851 = vmatmul.f32.gmra.mxu0 %v314
        %v852 = vpop.f32.mrf.mxu0
        %v853 = vadd.f32 %v830, %v852
        %854 = vdwg.mxu0
        %855 = vmatpush.msra.mxu0 %v482
        %856 = vmatpush.msra.mxu0 %v480
        %857 = vmatpush.msra.mxu0 %v478
        %858 = vmatpush.msra.mxu0 %v476
        %859 = vmatpush.msra.mxu0 %v474
        %860 = vmatpush.msra.mxu0 %v472
        %861 = vmatpush.msra.mxu0 %v470
        %862 = vmatpush.msra.mxu0 %v468
        %863 = vmatpush.msra.mxu0 %v466
        %864 = vmatpush.msra.mxu0 %v464
        %865 = vmatpush.msra.mxu0 %v462
        %866 = vmatpush.msra.mxu0 %v460
        %867 = vmatpush.msra.mxu0 %v458
        %868 = vmatpush.msra.mxu0 %v456
        %869 = vmatpush.msra.mxu0 %v454
        %870 = vmatpush.msra.mxu0 %v452
        %871 = vmatmul.f32.gmra.mxu0 %v307
        %v872 = vpop.f32.mrf.mxu0
        %v873 = vadd.f32 %v850, %v872
        %874 = vmatmul.f32.gmra.mxu0 %v315
        %v875 = vpop.f32.mrf.mxu0
        %v876 = vadd.f32 %v853, %v875
        %877 = vdwg.mxu0
        %878 = vmatpush.msra.mxu0 %v514
        %879 = vmatpush.msra.mxu0 %v512
        %880 = vmatpush.msra.mxu0 %v510
        %881 = vmatpush.msra.mxu0 %v508
        %882 = vmatpush.msra.mxu0 %v506
        %883 = vmatpush.msra.mxu0 %v504
        %884 = vmatpush.msra.mxu0 %v502
        %885 = vmatpush.msra.mxu0 %v500
        %886 = vmatpush.msra.mxu0 %v498
        %887 = vmatpush.msra.mxu0 %v496
        %888 = vmatpush.msra.mxu0 %v494
        %889 = vmatpush.msra.mxu0 %v492
        %890 = vmatpush.msra.mxu0 %v490
        %891 = vmatpush.msra.mxu0 %v488
        %892 = vmatpush.msra.mxu0 %v486
        %893 = vmatpush.msra.mxu0 %v484
        %894 = vmatmul.f32.gmra.mxu0 %v308
        %v895 = vpop.f32.mrf.mxu0
        %v896 = vadd.f32 %v873, %v895
        %897 = vmatmul.f32.gmra.mxu0 %v316
        %v898 = vpop.f32.mrf.mxu0
        %v899 = vadd.f32 %v876, %v898
        %900 = vdwg.mxu0
        %901 = vmatpush.msra.mxu0 %v546
        %902 = vmatpush.msra.mxu0 %v544
        %903 = vmatpush.msra.mxu0 %v542
        %904 = vmatpush.msra.mxu0 %v540
        %905 = vmatpush.msra.mxu0 %v538
        %906 = vmatpush.msra.mxu0 %v536
        %907 = vmatpush.msra.mxu0 %v534
        %908 = vmatpush.msra.mxu0 %v532
        %909 = vmatpush.msra.mxu0 %v530
        %910 = vmatpush.msra.mxu0 %v528
        %911 = vmatpush.msra.mxu0 %v526
        %912 = vmatpush.msra.mxu0 %v524
        %913 = vmatpush.msra.mxu0 %v522
        %914 = vmatpush.msra.mxu0 %v520
        %915 = vmatpush.msra.mxu0 %v518
        %916 = vmatpush.msra.mxu0 %v516
        %917 = vmatmul.f32.gmra.mxu0 %v309
        %v918 = vpop.f32.mrf.mxu0
        %v919 = vadd.f32 %v896, %v918
        %920 = vmatmul.f32.gmra.mxu0 %v317
        %v921 = vpop.f32.mrf.mxu0
        %v922 = vadd.f32 %v899, %v921
        %923 = vdwg.mxu0
        %924 = vmatpush.msra.mxu0 %v578
        %925 = vmatpush.msra.mxu0 %v576
        %926 = vmatpush.msra.mxu0 %v574
        %927 = vmatpush.msra.mxu0 %v572
        %928 = vmatpush.msra.mxu0 %v570
        %929 = vmatpush.msra.mxu0 %v568
        %930 = vmatpush.msra.mxu0 %v566
        %931 = vmatpush.msra.mxu0 %v564
        %932 = vmatpush.msra.mxu0 %v562
        %933 = vmatpush.msra.mxu0 %v560
        %934 = vmatpush.msra.mxu0 %v558
        %935 = vmatpush.msra.mxu0 %v556
        %936 = vmatpush.msra.mxu0 %v554
        %937 = vmatpush.msra.mxu0 %v552
        %938 = vmatpush.msra.mxu0 %v550
        %939 = vmatpush.msra.mxu0 %v548
        %940 = vmatmul.f32.gmra.mxu0 %v310
        %v941 = vpop.f32.mrf.mxu0
        %v942 = vadd.f32 %v919, %v941
        %943 = vmatmul.f32.gmra.mxu0 %v318
        %v944 = vpop.f32.mrf.mxu0
        %v945 = vadd.f32 %v922, %v944
        %946 = vdwg.mxu0
        %v947 = vadd.f32 %v319, %v758
        %v948 = vadd.f32 %v320, %v942
        %v949 = vadd.f32 %v321, %v761
        %v950 = vadd.f32 %v322, %v945
        %951 = vst [vmem:[%s241] sm:$0xff] %v947
        %952 = vst [vmem:[%s241 + $0x8] sm:$0xff] %v948
        %953 = vst [vmem:[%s241 + $0x10] sm:$0xff] %v949
        %954 = vst [vmem:[%s241 + $0x18] sm:$0xff] %v950
        %s955 = sand.u32 %s116, 1
        %s956 = scalar_lea.sflag [#allocation4], %s955
        %s957 = sand.u32 %s116, 1
        %s958 = smul.addr %s957, 32
        %s959 = scalar_lea.vmem [#allocation7], %s958
        // Predicated region
        $region41: #{tpu_custom_call.1} parent=27 // pred_check
          %p960 = pneg %p126
        $region42: #{tpu_custom_call.1} parent=27 // pred_check_branch
          %962 = sbr.rel (%p960) target = $region44
        $region43: #{tpu_custom_call.1} parent=27 // pred_region
          %s963 = smul.u32 2, %s29
          %s964 = smul.u32 2, %s30
          %966 = vsyncadd %s956, 0
          %s967 = smul.addr %s963, 2
          %s968 = sadd.s32 %s964, %s967
          %s969 = smul.addr %s28, 4
          %s970 = sadd.s32 %s968, %s969
          %s971 = smul.addr %s970, 8
          %s972 = scalar_lea.hbm %s2, %s971
          %s973 = sshll.u32 %s959, 4
          %s974 = int_to_ptr.vmem [resolvable:$true] %s973
          %s975 = sshll.u32 %s972, 4
          %s976 = int_to_ptr.hbm [resolvable:$true] %s975
          %981 = dma.vmem_to_hbm [thread:$0]  %s974, 512, %s976, %s956, 256, 256, 16
        $region44: #{tpu_custom_call.1} parent=27 // pred_fallthru
          _
      $region28: #{tpu_custom_call.1} parent=5 // pred_fallthru
        _
      %p982 = scmp.le.s32.totalorder 2, %s17
      // Predicated region
      $region45: #{tpu_custom_call.1} parent=5 // pred_check
        %p983 = pneg %p982
      $region46: #{tpu_custom_call.1} parent=5 // pred_check_branch
        %985 = sbr.rel (%p983) target = $region48
      $region47: #{tpu_custom_call.1} parent=5 // pred_region
        %s986 = ssub.s32 %s17, 2
        // Predicated region
        $region49: #{tpu_custom_call.1} parent=47 // pred_check
          %p987 = pneg %p132
        $region50: #{tpu_custom_call.1} parent=47 // pred_check_branch
          %989 = sbr.rel (%p987) target = $region52
        $region51: #{tpu_custom_call.1} parent=47 // pred_region
          %s990 = sand.u32 %s117, 1
          %s991 = scalar_lea.sflag [#allocation4], %s990
          %s992 = sand.u32 %s117, 1
          %s993 = smul.addr %s992, 32
          %s994 = scalar_lea.vmem [#allocation7], %s993
          %996 = dma.done %s991, 512
        $region52: #{tpu_custom_call.1} parent=47 // pred_fallthru
          _
      $region48: #{tpu_custom_call.1} parent=5 // pred_fallthru
        _
    $region6: #{tpu_custom_call.1} parent=1 // loop_footer
      %s21 = sadd.s32 1, %s17
    $region7: #{tpu_custom_call.1} parent=1 // loop_footer_branch
      %16 = sbr.rel target = $region3
    $region8: #{tpu_custom_call.1} parent=1 // loop_exit
      _
    %997 = vsyncpa [#allocation3], 1
    %s998 = scalar_lea.sflag [#allocation3], 1
    %999 = vsyncpa %s998, 1
    %1000 = vsyncpa [#allocation6], 1
    %s1001 = scalar_lea.sflag [#allocation6], 1
    %1002 = vsyncpa %s1001, 1
    %1003 = vsyncpa [#allocation4], 1
    %s1004 = scalar_lea.sflag [#allocation4], 1
    %1005 = vsyncpa %s1004, 1

</llo_original>
